<compile_context>
chip_gen: v7x
topology: tpu7x:2x2x1
jax: 0.10.0
libtpu: 0.0.40
codegen_flags: <defaults>
</compile_context>

<pallas_src>
import functools

import jax
import jax.numpy as jnp
from jax.experimental import pallas as pl
from jax.experimental.pallas import tpu as pltpu


BN_EPS = 1e-5


def _make_fused_kernel(num_layers, batch, inv_count):
    """Builds the fused kernel, closing over static layer count / batch size."""

    def kernel(x_ref, *refs):
        o_ref = refs[-1]
        p_refs = refs[:-1]  # 4 refs per layer: w, bias, gamma, beta

        # Activations for every batch element stay resident (VMEM / vregs),
        # in [C, N] layout (channels on sublanes, points on lanes == NCL).
        acts = [x_ref[b].astype(jnp.float32) for b in range(batch)]

        for l in range(num_layers):
            w = p_refs[4 * l][...].astype(jnp.float32)   # [Cout, Cin] (native)
            bias = p_refs[4 * l + 1][...]                # [Cout, 1]
            gamma = p_refs[4 * l + 2][...]               # [Cout, 1]
            beta = p_refs[4 * l + 3][...]                # [Cout, 1]

            # 1x1 conv == channel matmul on the MXU; no transpose needed.
            ys = []
            s = None
            ss = None
            for b in range(batch):
                y = jnp.dot(w, acts[b], preferred_element_type=jnp.float32) + bias
                ys.append(y)
                # One-pass BN statistics: accumulate sum and sum of squares.
                ps = jnp.sum(y, axis=-1, keepdims=True)        # [Cout, 1]
                pss = jnp.sum(y * y, axis=-1, keepdims=True)   # [Cout, 1]
                s = ps if s is None else s + ps
                ss = pss if ss is None else ss + pss

            mean = s * inv_count
            var = ss * inv_count - mean * mean                 # biased variance
            inv_std = jax.lax.rsqrt(var + BN_EPS)
            scale = gamma * inv_std                            # [Cout, 1]
            shift = beta - mean * scale                        # [Cout, 1]

            # Fused BN + ReLU epilogue: one FMA + one max per element.
            acts = [jnp.maximum(y * scale + shift, 0.0) for y in ys]

        for b in range(batch):
            o_ref[b] = acts[b].astype(o_ref.dtype)

    return kernel


def _fused_forward(x, params):
    """x: [B, Cin, N] -> [B, Cout_last, N], all layers in one pallas_call."""
    B, c_in, N = x.shape
    num_layers = len(params)
    c_out = params[-1]["w"].shape[0]
    inv_count = 1.0 / float(B * N)

    flat_args = [x]
    in_specs = [pl.BlockSpec((B, c_in, N), lambda: (0, 0, 0))]

    flops = 0
    transcendentals = 0
    bytes_accessed = B * c_in * N * 4 + B * c_out * N * 4
    last = c_in
    for p in params:
        cout = p["w"].shape[0]
        for arr in (p["w"], p["b"], p["gamma"], p["beta"]):
            flat_args.append(arr)
            in_specs.append(pl.BlockSpec(arr.shape, lambda: (0, 0)))
        flops += 2 * B * N * last * cout + 6 * B * N * cout   # matmul + BN/ReLU
        transcendentals += cout                               # rsqrt per channel
        bytes_accessed += (last + 3) * cout * 4
        last = cout

    # Rough resident-VMEM budget: I/O (double-buffered) + live activations.
    max_c = max([c_in] + [p["w"].shape[0] for p in params])
    est = 2 * bytes_accessed + 3 * B * max_c * N * 4 + (4 << 20)
    vmem_limit = int(min(64 << 20, max(32 << 20, est)))

    return pl.pallas_call(
        _make_fused_kernel(num_layers, B, inv_count),
        out_shape=jax.ShapeDtypeStruct((B, c_out, N), jnp.float32),
        in_specs=in_specs,
        out_specs=pl.BlockSpec((B, c_out, N), lambda: (0, 0, 0)),
        compiler_params=pltpu.CompilerParams(vmem_limit_bytes=vmem_limit),
        cost_estimate=pl.CostEstimate(
            flops=flops,
            transcendentals=transcendentals,
            bytes_accessed=bytes_accessed,
        ),
    )(*flat_args)


@functools.partial(jax.jit, static_argnames=("b_shared",))
def mlp_net_forward(x, params, b_shared=True):
    """MLPNet forward.

    b_shared=True : x [B, Cin, N] -> [B, Cout, N]   (Conv1d k=1 path)
    b_shared=False: x [B, Cin]    -> [B, Cout]      (Linear path)
    params: list of dicts with 'w' [Cout, Cin] and 'b'/'gamma'/'beta' [Cout, 1].
    """
    if b_shared:
        return _fused_forward(x, params)
    # Linear path: channels on sublanes, batch on lanes, so BN over the lane
    # axis == BatchNorm1d over the batch.  Same fused kernel, "B"=1, "N"=batch.
    y = _fused_forward(jnp.transpose(x)[None], params)   # [1, Cout, B]
    # TODO(synk): Dropout (b_shared=False, dropout>0) not implemented; module
    # default dropout=0.0 makes it a no-op.
    return jnp.transpose(y[0])


def init_params(key, nch_input, nch_layers):
    """Deterministic synthetic params; shapes match the PyTorch module."""
    params = []
    last = nch_input
    for outp in nch_layers:
        key, kw, kb, kg, kbt = jax.random.split(key, 5)
        bound = 1.0 / float(jnp.sqrt(float(last)))
        params.append(
            {
                # Conv1d weight [Cout, Cin, 1] with kernel dim squeezed.
                "w": jax.random.uniform(kw, (outp, last), jnp.float32, -bound, bound),
                "b": jax.random.uniform(kb, (outp, 1), jnp.float32, -bound, bound),
                # BN affine params (perturbed from 1/0 so the math is exercised).
                "gamma": 1.0 + 0.1 * jax.random.normal(kg, (outp, 1), jnp.float32),
                "beta": 0.1 * jax.random.normal(kbt, (outp, 1), jnp.float32),
            }
        )
        last = outp
    return params


def mlp_net_reference(x, params):
    """Pure-JAX reference of the PyTorch forward (b_shared=True, train-mode BN)."""
    y = x
    for p in params:
        y = jnp.einsum("bcn,oc->bon", y, p["w"]) + p["b"][None]   # Conv1d k=1
        mean = jnp.mean(y, axis=(0, 2), keepdims=True)
        var = jnp.mean((y - mean) ** 2, axis=(0, 2), keepdims=True)  # biased
        y = (y - mean) / jnp.sqrt(var + BN_EPS)
        y = p["gamma"][None] * y + p["beta"][None]
        y = jnp.maximum(y, 0.0)
    return y


if __name__ == "__main__":
    key = jax.random.PRNGKey(0)
    k_in, k_params = jax.random.split(key)

    B, Cin, N = 2, 4, 16
    nch_layers = (32, 64)

    x = jax.random.normal(k_in, (B, Cin, N), dtype=jnp.float32)
    params = init_params(k_params, Cin, nch_layers)

    out = mlp_net_forward(x, params, b_shared=True)
    out = jax.block_until_ready(out)

    ref = mlp_net_reference(x, params)
    assert out.shape == (B, nch_layers[-1], N), out.shape
    assert jnp.allclose(out, ref, atol=1e-4, rtol=1e-4), (
        float(jnp.max(jnp.abs(out - ref)))
    )

    print("KERNEL_OK")
</pallas_src>

<mosaic_0001>
module attributes {stable_mosaic.version = 11 : i64} {
  func.func @kernel(%arg0: memref<2x4x16xf32, #tpu.memory_space<vmem>>, %arg1: memref<32x4xf32, #tpu.memory_space<vmem>>, %arg2: memref<32x1xf32, #tpu.memory_space<vmem>>, %arg3: memref<32x1xf32, #tpu.memory_space<vmem>>, %arg4: memref<32x1xf32, #tpu.memory_space<vmem>>, %arg5: memref<64x32xf32, #tpu.memory_space<vmem>>, %arg6: memref<64x1xf32, #tpu.memory_space<vmem>>, %arg7: memref<64x1xf32, #tpu.memory_space<vmem>>, %arg8: memref<64x1xf32, #tpu.memory_space<vmem>>, %arg9: memref<2x64x16xf32, #tpu.memory_space<vmem>>) attributes {dimension_semantics = [], scalar_prefetch = 0 : i64, scratch_operands = 0 : i64, tpu.core_type = #tpu.core_type<tc>} {
    %c0 = arith.constant 0 : index
    %c0_0 = arith.constant 0 : index
    %c0_1 = arith.constant 0 : index
    %0 = vector.load %arg0[%c0, %c0_0, %c0_1] : memref<2x4x16xf32, #tpu.memory_space<vmem>>, vector<1x4x16xf32>
    %1 = vector.shape_cast %0 : vector<1x4x16xf32> to vector<4x16xf32>
    %c1 = arith.constant 1 : index
    %c0_2 = arith.constant 0 : index
    %c0_3 = arith.constant 0 : index
    %2 = vector.load %arg0[%c1, %c0_2, %c0_3] : memref<2x4x16xf32, #tpu.memory_space<vmem>>, vector<1x4x16xf32>
    %3 = vector.shape_cast %2 : vector<1x4x16xf32> to vector<4x16xf32>
    %c0_4 = arith.constant 0 : index
    %c0_5 = arith.constant 0 : index
    %4 = vector.load %arg1[%c0_4, %c0_5] : memref<32x4xf32, #tpu.memory_space<vmem>>, vector<32x4xf32>
    %c0_6 = arith.constant 0 : index
    %c0_7 = arith.constant 0 : index
    %5 = vector.load %arg2[%c0_6, %c0_7] : memref<32x1xf32, #tpu.memory_space<vmem>>, vector<32x1xf32>
    %c0_8 = arith.constant 0 : index
    %c0_9 = arith.constant 0 : index
    %6 = vector.load %arg3[%c0_8, %c0_9] : memref<32x1xf32, #tpu.memory_space<vmem>>, vector<32x1xf32>
    %c0_10 = arith.constant 0 : index
    %c0_11 = arith.constant 0 : index
    %7 = vector.load %arg4[%c0_10, %c0_11] : memref<32x1xf32, #tpu.memory_space<vmem>>, vector<32x1xf32>
    %cst = arith.constant dense<0.000000e+00> : vector<32x16xf32>
    %8 = tpu.matmul %4, %1, %cst {dimension_numbers = #tpu.dot_dimension_numbers<[1], [0], [0], [1], [0, 0, 1, 1], [], []>} : vector<32x4xf32>, vector<4x16xf32>, vector<32x16xf32> -> vector<32x16xf32>
    %9 = vector.broadcast %5 : vector<32x1xf32> to vector<32x16xf32>
    %10 = arith.addf %8, %9 : vector<32x16xf32>
    %cst_12 = arith.constant dense<0.000000e+00> : vector<32xf32>
    %11 = vector.multi_reduction <add>, %10, %cst_12 [1] : vector<32x16xf32> to vector<32xf32>
    %12 = vector.shape_cast %11 : vector<32xf32> to vector<32x1xf32>
    %13 = arith.mulf %10, %10 : vector<32x16xf32>
    %cst_13 = arith.constant dense<0.000000e+00> : vector<32xf32>
    %14 = vector.multi_reduction <add>, %13, %cst_13 [1] : vector<32x16xf32> to vector<32xf32>
    %15 = vector.shape_cast %14 : vector<32xf32> to vector<32x1xf32>
    %cst_14 = arith.constant dense<0.000000e+00> : vector<32x16xf32>
    %16 = tpu.matmul %4, %3, %cst_14 {dimension_numbers = #tpu.dot_dimension_numbers<[1], [0], [0], [1], [0, 0, 1, 1], [], []>} : vector<32x4xf32>, vector<4x16xf32>, vector<32x16xf32> -> vector<32x16xf32>
    %17 = vector.broadcast %5 : vector<32x1xf32> to vector<32x16xf32>
    %18 = arith.addf %16, %17 : vector<32x16xf32>
    %cst_15 = arith.constant dense<0.000000e+00> : vector<32xf32>
    %19 = vector.multi_reduction <add>, %18, %cst_15 [1] : vector<32x16xf32> to vector<32xf32>
    %20 = vector.shape_cast %19 : vector<32xf32> to vector<32x1xf32>
    %21 = arith.mulf %18, %18 : vector<32x16xf32>
    %cst_16 = arith.constant dense<0.000000e+00> : vector<32xf32>
    %22 = vector.multi_reduction <add>, %21, %cst_16 [1] : vector<32x16xf32> to vector<32xf32>
    %23 = vector.shape_cast %22 : vector<32xf32> to vector<32x1xf32>
    %24 = arith.addf %12, %20 : vector<32x1xf32>
    %25 = arith.addf %15, %23 : vector<32x1xf32>
    %cst_17 = arith.constant 3.125000e-02 : f32
    %26 = vector.broadcast %cst_17 : f32 to vector<32x1xf32>
    %27 = arith.mulf %24, %26 : vector<32x1xf32>
    %cst_18 = arith.constant 3.125000e-02 : f32
    %28 = vector.broadcast %cst_18 : f32 to vector<32x1xf32>
    %29 = arith.mulf %25, %28 : vector<32x1xf32>
    %30 = arith.mulf %27, %27 : vector<32x1xf32>
    %31 = arith.subf %29, %30 : vector<32x1xf32>
    %cst_19 = arith.constant 9.99999974E-6 : f32
    %32 = vector.broadcast %cst_19 : f32 to vector<32x1xf32>
    %33 = arith.addf %31, %32 : vector<32x1xf32>
    %34 = math.rsqrt %33 : vector<32x1xf32>
    %35 = arith.mulf %6, %34 : vector<32x1xf32>
    %36 = arith.mulf %27, %35 : vector<32x1xf32>
    %37 = arith.subf %7, %36 : vector<32x1xf32>
    %38 = vector.broadcast %35 : vector<32x1xf32> to vector<32x16xf32>
    %39 = arith.mulf %10, %38 : vector<32x16xf32>
    %40 = vector.broadcast %37 : vector<32x1xf32> to vector<32x16xf32>
    %41 = arith.addf %39, %40 : vector<32x16xf32>
    %cst_20 = arith.constant 0.000000e+00 : f32
    %42 = vector.broadcast %cst_20 : f32 to vector<32x16xf32>
    %43 = arith.maximumf %41, %42 : vector<32x16xf32>
    %44 = vector.broadcast %35 : vector<32x1xf32> to vector<32x16xf32>
    %45 = arith.mulf %18, %44 : vector<32x16xf32>
    %46 = vector.broadcast %37 : vector<32x1xf32> to vector<32x16xf32>
    %47 = arith.addf %45, %46 : vector<32x16xf32>
    %cst_21 = arith.constant 0.000000e+00 : f32
    %48 = vector.broadcast %cst_21 : f32 to vector<32x16xf32>
    %49 = arith.maximumf %47, %48 : vector<32x16xf32>
    %c0_22 = arith.constant 0 : index
    %c0_23 = arith.constant 0 : index
    %50 = vector.load %arg5[%c0_22, %c0_23] : memref<64x32xf32, #tpu.memory_space<vmem>>, vector<64x32xf32>
    %c0_24 = arith.constant 0 : index
    %c0_25 = arith.constant 0 : index
    %51 = vector.load %arg6[%c0_24, %c0_25] : memref<64x1xf32, #tpu.memory_space<vmem>>, vector<64x1xf32>
    %c0_26 = arith.constant 0 : index
    %c0_27 = arith.constant 0 : index
    %52 = vector.load %arg7[%c0_26, %c0_27] : memref<64x1xf32, #tpu.memory_space<vmem>>, vector<64x1xf32>
    %c0_28 = arith.constant 0 : index
    %c0_29 = arith.constant 0 : index
    %53 = vector.load %arg8[%c0_28, %c0_29] : memref<64x1xf32, #tpu.memory_space<vmem>>, vector<64x1xf32>
    %cst_30 = arith.constant dense<0.000000e+00> : vector<64x16xf32>
    %54 = tpu.matmul %50, %43, %cst_30 {dimension_numbers = #tpu.dot_dimension_numbers<[1], [0], [0], [1], [0, 0, 1, 1], [], []>} : vector<64x32xf32>, vector<32x16xf32>, vector<64x16xf32> -> vector<64x16xf32>
    %55 = vector.broadcast %51 : vector<64x1xf32> to vector<64x16xf32>
    %56 = arith.addf %54, %55 : vector<64x16xf32>
    %cst_31 = arith.constant dense<0.000000e+00> : vector<64xf32>
    %57 = vector.multi_reduction <add>, %56, %cst_31 [1] : vector<64x16xf32> to vector<64xf32>
    %58 = vector.shape_cast %57 : vector<64xf32> to vector<64x1xf32>
    %59 = arith.mulf %56, %56 : vector<64x16xf32>
    %cst_32 = arith.constant dense<0.000000e+00> : vector<64xf32>
    %60 = vector.multi_reduction <add>, %59, %cst_32 [1] : vector<64x16xf32> to vector<64xf32>
    %61 = vector.shape_cast %60 : vector<64xf32> to vector<64x1xf32>
    %cst_33 = arith.constant dense<0.000000e+00> : vector<64x16xf32>
    %62 = tpu.matmul %50, %49, %cst_33 {dimension_numbers = #tpu.dot_dimension_numbers<[1], [0], [0], [1], [0, 0, 1, 1], [], []>} : vector<64x32xf32>, vector<32x16xf32>, vector<64x16xf32> -> vector<64x16xf32>
    %63 = vector.broadcast %51 : vector<64x1xf32> to vector<64x16xf32>
    %64 = arith.addf %62, %63 : vector<64x16xf32>
    %cst_34 = arith.constant dense<0.000000e+00> : vector<64xf32>
    %65 = vector.multi_reduction <add>, %64, %cst_34 [1] : vector<64x16xf32> to vector<64xf32>
    %66 = vector.shape_cast %65 : vector<64xf32> to vector<64x1xf32>
    %67 = arith.mulf %64, %64 : vector<64x16xf32>
    %cst_35 = arith.constant dense<0.000000e+00> : vector<64xf32>
    %68 = vector.multi_reduction <add>, %67, %cst_35 [1] : vector<64x16xf32> to vector<64xf32>
    %69 = vector.shape_cast %68 : vector<64xf32> to vector<64x1xf32>
    %70 = arith.addf %58, %66 : vector<64x1xf32>
    %71 = arith.addf %61, %69 : vector<64x1xf32>
    %cst_36 = arith.constant 3.125000e-02 : f32
    %72 = vector.broadcast %cst_36 : f32 to vector<64x1xf32>
    %73 = arith.mulf %70, %72 : vector<64x1xf32>
    %cst_37 = arith.constant 3.125000e-02 : f32
    %74 = vector.broadcast %cst_37 : f32 to vector<64x1xf32>
    %75 = arith.mulf %71, %74 : vector<64x1xf32>
    %76 = arith.mulf %73, %73 : vector<64x1xf32>
    %77 = arith.subf %75, %76 : vector<64x1xf32>
    %cst_38 = arith.constant 9.99999974E-6 : f32
    %78 = vector.broadcast %cst_38 : f32 to vector<64x1xf32>
    %79 = arith.addf %77, %78 : vector<64x1xf32>
    %80 = math.rsqrt %79 : vector<64x1xf32>
    %81 = arith.mulf %52, %80 : vector<64x1xf32>
    %82 = arith.mulf %73, %81 : vector<64x1xf32>
    %83 = arith.subf %53, %82 : vector<64x1xf32>
    %84 = vector.broadcast %81 : vector<64x1xf32> to vector<64x16xf32>
    %85 = arith.mulf %56, %84 : vector<64x16xf32>
    %86 = vector.broadcast %83 : vector<64x1xf32> to vector<64x16xf32>
    %87 = arith.addf %85, %86 : vector<64x16xf32>
    %cst_39 = arith.constant 0.000000e+00 : f32
    %88 = vector.broadcast %cst_39 : f32 to vector<64x16xf32>
    %89 = arith.maximumf %87, %88 : vector<64x16xf32>
    %90 = vector.broadcast %81 : vector<64x1xf32> to vector<64x16xf32>
    %91 = arith.mulf %64, %90 : vector<64x16xf32>
    %92 = vector.broadcast %83 : vector<64x1xf32> to vector<64x16xf32>
    %93 = arith.addf %91, %92 : vector<64x16xf32>
    %cst_40 = arith.constant 0.000000e+00 : f32
    %94 = vector.broadcast %cst_40 : f32 to vector<64x16xf32>
    %95 = arith.maximumf %93, %94 : vector<64x16xf32>
    %c0_41 = arith.constant 0 : index
    %c0_42 = arith.constant 0 : index
    %c0_43 = arith.constant 0 : index
    %96 = vector.load %arg9[%c0_41, %c0_42, %c0_43] : memref<2x64x16xf32, #tpu.memory_space<vmem>>, vector<1x64x16xf32>
    %97 = vector.shape_cast %96 : vector<1x64x16xf32> to vector<64x16xf32>
    %98 = vector.shape_cast %89 : vector<64x16xf32> to vector<1x64x16xf32>
    tpu.vector_store %arg9[%c0_41, %c0_42, %c0_43], %98 {strides = array<i32>} : memref<2x64x16xf32, #tpu.memory_space<vmem>>, vector<1x64x16xf32>,
    %c1_44 = arith.constant 1 : index
    %c0_45 = arith.constant 0 : index
    %c0_46 = arith.constant 0 : index
    %99 = vector.load %arg9[%c1_44, %c0_45, %c0_46] : memref<2x64x16xf32, #tpu.memory_space<vmem>>, vector<1x64x16xf32>
    %100 = vector.shape_cast %99 : vector<1x64x16xf32> to vector<64x16xf32>
    %101 = vector.shape_cast %95 : vector<64x16xf32> to vector<1x64x16xf32>
    tpu.vector_store %arg9[%c1_44, %c0_45, %c0_46], %101 {strides = array<i32>} : memref<2x64x16xf32, #tpu.memory_space<vmem>>, vector<1x64x16xf32>,
    return
  }
}

</mosaic_0001>

<llo_original>
// kernel: mlp_net_forward.1
$region0: #{mlp_net_forward.1}
  #allocation0 [shape = 'u32[]', space=smem, size = 0x4, offset = 0x4, fixed_abs, tag = 'smem constant byte address 0x4 - core index']
  #allocation1 [shape = 'u32[144,128]{1,0:T(1,128)}', space=vmem, size = 0x12000, scoped, tag = 'internal scratch']
  %s0 = inlined_call_operand.vmem [shape: f32[2,4,16], index: 0, kind: input, shape index: {}]
  %s1 = inlined_call_operand.vmem [shape: f32[32,4], index: 1, kind: input, shape index: {}]
  %s2 = inlined_call_operand.vmem [shape: f32[32,1], index: 2, kind: input, shape index: {}]
  %s3 = inlined_call_operand.vmem [shape: f32[32,1], index: 3, kind: input, shape index: {}]
  %s4 = inlined_call_operand.vmem [shape: f32[32,1], index: 4, kind: input, shape index: {}]
  %s5 = inlined_call_operand.vmem [shape: f32[64,32], index: 5, kind: input, shape index: {}]
  %s6 = inlined_call_operand.vmem [shape: f32[64,1], index: 6, kind: input, shape index: {}]
  %s7 = inlined_call_operand.vmem [shape: f32[64,1], index: 7, kind: input, shape index: {}]
  %s8 = inlined_call_operand.vmem [shape: f32[64,1], index: 8, kind: input, shape index: {}]
  %s9 = inlined_call_operand.vmem [shape: f32[2,64,16], index: 9, kind: output, shape index: {}]
  %s10 = sld [smem:[#allocation0]]
  $region46: #{mlp_net_forward.1} parent=0
    _
  %s12 = ssub.s32 1, %s10
  %s13 = scalar_select 0, %s12, %s10
  // Predicated region
  $region2: #{mlp_net_forward.1} parent=0 // pred_check
    _
  $region3: #{mlp_net_forward.1} parent=0 // pred_check_branch
    %15 = sbr.rel (0) target = $region5
  $region4: #{mlp_net_forward.1} parent=0 // pred_region
    _
  $region5: #{mlp_net_forward.1} parent=0 // pred_fallthru
    _
  // Predicated region
  $region6: #{mlp_net_forward.1} parent=0 // pred_check
    _
  $region7: #{mlp_net_forward.1} parent=0 // pred_check_branch
    %17 = sbr.rel (0) target = $region9
  $region8: #{mlp_net_forward.1} parent=0 // pred_region
    _
  $region9: #{mlp_net_forward.1} parent=0 // pred_fallthru
    _
  // Predicated region
  $region10: #{mlp_net_forward.1} parent=0 // pred_check
    _
  $region11: #{mlp_net_forward.1} parent=0 // pred_check_branch
    %19 = sbr.rel (0) target = $region13
  $region12: #{mlp_net_forward.1} parent=0 // pred_region
    _
  $region13: #{mlp_net_forward.1} parent=0 // pred_fallthru
    _
  // Predicated region
  $region14: #{mlp_net_forward.1} parent=0 // pred_check
    _
  $region15: #{mlp_net_forward.1} parent=0 // pred_check_branch
    %21 = sbr.rel (0) target = $region17
  $region16: #{mlp_net_forward.1} parent=0 // pred_region
    _
  $region17: #{mlp_net_forward.1} parent=0 // pred_fallthru
    _
  // Predicated region
  $region18: #{mlp_net_forward.1} parent=0 // pred_check
    _
  $region19: #{mlp_net_forward.1} parent=0 // pred_check_branch
    %23 = sbr.rel (0) target = $region21
  $region20: #{mlp_net_forward.1} parent=0 // pred_region
    _
  $region21: #{mlp_net_forward.1} parent=0 // pred_fallthru
    _
  // Predicated region
  $region22: #{mlp_net_forward.1} parent=0 // pred_check
    _
  $region23: #{mlp_net_forward.1} parent=0 // pred_check_branch
    %25 = sbr.rel (0) target = $region25
  $region24: #{mlp_net_forward.1} parent=0 // pred_region
    _
  $region25: #{mlp_net_forward.1} parent=0 // pred_fallthru
    _
  // Predicated region
  $region26: #{mlp_net_forward.1} parent=0 // pred_check
    _
  $region27: #{mlp_net_forward.1} parent=0 // pred_check_branch
    %27 = sbr.rel (0) target = $region29
  $region28: #{mlp_net_forward.1} parent=0 // pred_region
    _
  $region29: #{mlp_net_forward.1} parent=0 // pred_fallthru
    _
  // Predicated region
  $region30: #{mlp_net_forward.1} parent=0 // pred_check
    _
  $region31: #{mlp_net_forward.1} parent=0 // pred_check_branch
    %29 = sbr.rel (0) target = $region33
  $region32: #{mlp_net_forward.1} parent=0 // pred_region
    _
  $region33: #{mlp_net_forward.1} parent=0 // pred_fallthru
    _
  // Predicated region
  $region34: #{mlp_net_forward.1} parent=0 // pred_check
    _
  $region35: #{mlp_net_forward.1} parent=0 // pred_check_branch
    %31 = sbr.rel (0) target = $region37
  $region36: #{mlp_net_forward.1} parent=0 // pred_region
    _
  $region37: #{mlp_net_forward.1} parent=0 // pred_fallthru
    _
  %v32 = vld [vmem:[%s0] sm:$0xf]
  %s33 = scalar_lea.vmem %s0, 4
  %v34 = vld [vmem:[%s33] sm:$0xf]
  %v35 = vld [vmem:[%s1] sm:$0xff]
  %v36 = vld [vmem:[%s1 + $0x8] sm:$0xff]
  %v37 = vld [vmem:[%s1 + $0x10] sm:$0xff]
  %v38 = vld [vmem:[%s1 + $0x18] sm:$0xff]
  %v39 = vld [vmem:[%s2] sm:$0xff]
  %v40 = vld [vmem:[%s2 + $0x8] sm:$0xff]
  %v41 = vld [vmem:[%s2 + $0x10] sm:$0xff]
  %v42 = vld [vmem:[%s2 + $0x18] sm:$0xff]
  %v43 = vld [vmem:[%s3] sm:$0xff]
  %v44 = vld [vmem:[%s3 + $0x8] sm:$0xff]
  %v45 = vld [vmem:[%s3 + $0x10] sm:$0xff]
  %v46 = vld [vmem:[%s3 + $0x18] sm:$0xff]
  %v47 = vld [vmem:[%s4] sm:$0xff]
  %v48 = vld [vmem:[%s4 + $0x8] sm:$0xff]
  %v49 = vld [vmem:[%s4 + $0x10] sm:$0xff]
  %v50 = vld [vmem:[%s4 + $0x18] sm:$0xff]
  %52 = vset.pattern.permute.xlu0 0
  %53 = vperm.xlu0 %52, %v39
  %v54 = vpop.permute.xlu0 %53
  %57 = vset.pattern.permute.xlu0 0
  %58 = vperm.xlu0 %57, %v40
  %v59 = vpop.permute.xlu0 %58
  %62 = vset.pattern.permute.xlu0 0
  %63 = vperm.xlu0 %62, %v41
  %v64 = vpop.permute.xlu0 %63
  %67 = vset.pattern.permute.xlu0 0
  %68 = vperm.xlu0 %67, %v42
  %v69 = vpop.permute.xlu0 %68
  %vm71 = vcmask 31744
  %v73 = vsel %vm71, %v35, 0
  %v76 = vsel %vm71, %v36, 0
  %v79 = vsel %vm71, %v37, 0
  %v82 = vsel %vm71, %v38, 0
  %vm84 = vcmask 1043456
  %v86 = vsel %vm84, %v32, 0
  %88 = vmatprep.subr.mxu0 0.0
  %89 = vmatpush1.msra.mxu0 %v86
  %90 = vmatprep.subr.mxu0 0.0
  %91 = vmatpush1.msra.mxu0 0.0
  %92 = vmatprep.subr.mxu0 0.0
  %93 = vmatpush1.msra.mxu0 0.0
  %94 = vmatprep.subr.mxu0 0.0
  %95 = vmatpush1.msra.mxu0 0.0
  %96 = vmatprep.subr.mxu0 0.0
  %97 = vmatpush1.msra.mxu0 0.0
  %98 = vmatprep.subr.mxu0 0.0
  %99 = vmatpush1.msra.mxu0 0.0
  %100 = vmatprep.subr.mxu0 0.0
  %101 = vmatpush1.msra.mxu0 0.0
  %102 = vmatprep.subr.mxu0 0.0
  %103 = vmatpush1.msra.mxu0 0.0
  %104 = vmatprep.subr.mxu0 0.0
  %105 = vmatpush1.msra.mxu0 0.0
  %106 = vmatprep.subr.mxu0 0.0
  %107 = vmatpush1.msra.mxu0 0.0
  %108 = vmatprep.subr.mxu0 0.0
  %109 = vmatpush1.msra.mxu0 0.0
  %110 = vmatprep.subr.mxu0 0.0
  %111 = vmatpush1.msra.mxu0 0.0
  %112 = vmatprep.subr.mxu0 0.0
  %113 = vmatpush1.msra.mxu0 0.0
  %114 = vmatprep.subr.mxu0 0.0
  %115 = vmatpush1.msra.mxu0 0.0
  %116 = vmatprep.subr.mxu0 0.0
  %117 = vmatpush1.msra.mxu0 0.0
  %118 = vmatprep.subr.mxu0 0.0
  %119 = vmatpush1.msra.mxu0 0.0
  %120 = vmatprep.subr.mxu0 0.0
  %121 = vmatpush1.msra.mxu0 0.0
  %122 = vmatprep.subr.mxu0 0.0
  %123 = vmatpush1.msra.mxu0 0.0
  %124 = vmatprep.subr.mxu0 0.0
  %125 = vmatpush1.msra.mxu0 0.0
  %126 = vmatprep.subr.mxu0 0.0
  %127 = vmatpush1.msra.mxu0 0.0
  %128 = vmatprep.subr.mxu0 0.0
  %129 = vmatpush1.msra.mxu0 0.0
  %130 = vmatprep.subr.mxu0 0.0
  %131 = vmatpush1.msra.mxu0 0.0
  %132 = vmatprep.subr.mxu0 0.0
  %133 = vmatpush1.msra.mxu0 0.0
  %134 = vmatprep.subr.mxu0 0.0
  %135 = vmatpush1.msra.mxu0 0.0
  %136 = vmatprep.subr.mxu0 0.0
  %137 = vmatpush1.msra.mxu0 0.0
  %138 = vmatprep.subr.mxu0 0.0
  %139 = vmatpush1.msra.mxu0 0.0
  %140 = vmatprep.subr.mxu0 0.0
  %141 = vmatpush1.msra.mxu0 0.0
  %142 = vmatprep.subr.mxu0 0.0
  %143 = vmatpush1.msra.mxu0 0.0
  %144 = vmatprep.subr.mxu0 0.0
  %145 = vmatpush1.msra.mxu0 0.0
  %146 = vmatprep.subr.mxu0 0.0
  %147 = vmatpush1.msra.mxu0 0.0
  %148 = vmatprep.subr.mxu0 0.0
  %149 = vmatpush1.msra.mxu0 0.0
  %150 = vmatprep.subr.mxu0 0.0
  %151 = vmatpush1.msra.mxu0 0.0
  %152 = vmatprep.mubr.f32.mxu0 0.0
  %153 = vmatmul.mubr.f32.gmra.mrb[0].mxu0 %v73
  %v154 = vpop.f32.mrb[0].mxu0
  %v155 = vadd.f32 %v54, %v154
  %v156 = vpop.f32.mrb[0].mxu0
  %157 = vmatprep.mubr.f32.mxu0 0.0
  %158 = vmatmul.mubr.f32.gmra.mrb[0].mxu0 %v76
  %v159 = vpop.f32.mrb[0].mxu0
  %v160 = vadd.f32 %v59, %v159
  %v161 = vpop.f32.mrb[0].mxu0
  %162 = vmatprep.mubr.f32.mxu0 0.0
  %163 = vmatmul.mubr.f32.gmra.mrb[0].mxu0 %v79
  %v164 = vpop.f32.mrb[0].mxu0
  %v165 = vadd.f32 %v64, %v164
  %v166 = vpop.f32.mrb[0].mxu0
  %167 = vmatprep.mubr.f32.mxu0 0.0
  %168 = vmatmul.mubr.f32.gmra.mrb[0].mxu0 %v82
  %v169 = vpop.f32.mrb[0].mxu0
  %v170 = vadd.f32 %v69, %v169
  %v171 = vpop.f32.mrb[0].mxu0
  %172 = vdwg.mxu0
  %vm173 = vcmask 130048
  %v174 = vsel %vm173, %v155, 0.0
  %175 = vadd.xlane.f32.xlu0 %v174
  %v176 = vpop.xlane.xlu0 %175
  %v177 = vsel %vm173, %v160, 0.0
  %178 = vadd.xlane.f32.xlu0 %v177
  %v179 = vpop.xlane.xlu0 %178
  %v180 = vsel %vm173, %v165, 0.0
  %181 = vadd.xlane.f32.xlu0 %v180
  %v182 = vpop.xlane.xlu0 %181
  %v183 = vsel %vm173, %v170, 0.0
  %184 = vadd.xlane.f32.xlu0 %v183
  %v185 = vpop.xlane.xlu0 %184
  %v186 = vmul.f32 %v155, %v155
  %v187 = vmul.f32 %v160, %v160
  %v188 = vmul.f32 %v165, %v165
  %v189 = vmul.f32 %v170, %v170
  %v190 = vsel %vm173, %v186, 0.0
  %191 = vadd.xlane.f32.xlu0 %v190
  %v192 = vpop.xlane.xlu0 %191
  %v193 = vsel %vm173, %v187, 0.0
  %194 = vadd.xlane.f32.xlu0 %v193
  %v195 = vpop.xlane.xlu0 %194
  %v196 = vsel %vm173, %v188, 0.0
  %197 = vadd.xlane.f32.xlu0 %v196
  %v198 = vpop.xlane.xlu0 %197
  %v199 = vsel %vm173, %v189, 0.0
  %200 = vadd.xlane.f32.xlu0 %v199
  %v201 = vpop.xlane.xlu0 %200
  %v203 = vsel %vm84, %v34, 0
  %205 = vmatprep.subr.mxu0 0.0
  %206 = vmatpush1.msra.mxu0 %v203
  %207 = vmatprep.subr.mxu0 0.0
  %208 = vmatpush1.msra.mxu0 0.0
  %209 = vmatprep.subr.mxu0 0.0
  %210 = vmatpush1.msra.mxu0 0.0
  %211 = vmatprep.subr.mxu0 0.0
  %212 = vmatpush1.msra.mxu0 0.0
  %213 = vmatprep.subr.mxu0 0.0
  %214 = vmatpush1.msra.mxu0 0.0
  %215 = vmatprep.subr.mxu0 0.0
  %216 = vmatpush1.msra.mxu0 0.0
  %217 = vmatprep.subr.mxu0 0.0
  %218 = vmatpush1.msra.mxu0 0.0
  %219 = vmatprep.subr.mxu0 0.0
  %220 = vmatpush1.msra.mxu0 0.0
  %221 = vmatprep.subr.mxu0 0.0
  %222 = vmatpush1.msra.mxu0 0.0
  %223 = vmatprep.subr.mxu0 0.0
  %224 = vmatpush1.msra.mxu0 0.0
  %225 = vmatprep.subr.mxu0 0.0
  %226 = vmatpush1.msra.mxu0 0.0
  %227 = vmatprep.subr.mxu0 0.0
  %228 = vmatpush1.msra.mxu0 0.0
  %229 = vmatprep.subr.mxu0 0.0
  %230 = vmatpush1.msra.mxu0 0.0
  %231 = vmatprep.subr.mxu0 0.0
  %232 = vmatpush1.msra.mxu0 0.0
  %233 = vmatprep.subr.mxu0 0.0
  %234 = vmatpush1.msra.mxu0 0.0
  %235 = vmatprep.subr.mxu0 0.0
  %236 = vmatpush1.msra.mxu0 0.0
  %237 = vmatprep.subr.mxu0 0.0
  %238 = vmatpush1.msra.mxu0 0.0
  %239 = vmatprep.subr.mxu0 0.0
  %240 = vmatpush1.msra.mxu0 0.0
  %241 = vmatprep.subr.mxu0 0.0
  %242 = vmatpush1.msra.mxu0 0.0
  %243 = vmatprep.subr.mxu0 0.0
  %244 = vmatpush1.msra.mxu0 0.0
  %245 = vmatprep.subr.mxu0 0.0
  %246 = vmatpush1.msra.mxu0 0.0
  %247 = vmatprep.subr.mxu0 0.0
  %248 = vmatpush1.msra.mxu0 0.0
  %249 = vmatprep.subr.mxu0 0.0
  %250 = vmatpush1.msra.mxu0 0.0
  %251 = vmatprep.subr.mxu0 0.0
  %252 = vmatpush1.msra.mxu0 0.0
  %253 = vmatprep.subr.mxu0 0.0
  %254 = vmatpush1.msra.mxu0 0.0
  %255 = vmatprep.subr.mxu0 0.0
  %256 = vmatpush1.msra.mxu0 0.0
  %257 = vmatprep.subr.mxu0 0.0
  %258 = vmatpush1.msra.mxu0 0.0
  %259 = vmatprep.subr.mxu0 0.0
  %260 = vmatpush1.msra.mxu0 0.0
  %261 = vmatprep.subr.mxu0 0.0
  %262 = vmatpush1.msra.mxu0 0.0
  %263 = vmatprep.subr.mxu0 0.0
  %264 = vmatpush1.msra.mxu0 0.0
  %265 = vmatprep.subr.mxu0 0.0
  %266 = vmatpush1.msra.mxu0 0.0
  %267 = vmatprep.subr.mxu0 0.0
  %268 = vmatpush1.msra.mxu0 0.0
  %269 = vmatprep.mubr.f32.mxu0 0.0
  %270 = vmatmul.mubr.f32.gmra.mrb[0].mxu0 %v73
  %v271 = vpop.f32.mrb[0].mxu0
  %v272 = vadd.f32 %v54, %v271
  %v273 = vpop.f32.mrb[0].mxu0
  %274 = vmatprep.mubr.f32.mxu0 0.0
  %275 = vmatmul.mubr.f32.gmra.mrb[0].mxu0 %v76
  %v276 = vpop.f32.mrb[0].mxu0
  %v277 = vadd.f32 %v59, %v276
  %v278 = vpop.f32.mrb[0].mxu0
  %279 = vmatprep.mubr.f32.mxu0 0.0
  %280 = vmatmul.mubr.f32.gmra.mrb[0].mxu0 %v79
  %v281 = vpop.f32.mrb[0].mxu0
  %v282 = vadd.f32 %v64, %v281
  %v283 = vpop.f32.mrb[0].mxu0
  %284 = vmatprep.mubr.f32.mxu0 0.0
  %285 = vmatmul.mubr.f32.gmra.mrb[0].mxu0 %v82
  %v286 = vpop.f32.mrb[0].mxu0
  %v287 = vadd.f32 %v69, %v286
  %v288 = vpop.f32.mrb[0].mxu0
  %289 = vdwg.mxu0
  %v290 = vsel %vm173, %v272, 0.0
  %291 = vadd.xlane.f32.xlu0 %v290
  %v292 = vpop.xlane.xlu0 %291
  %v293 = vsel %vm173, %v277, 0.0
  %294 = vadd.xlane.f32.xlu0 %v293
  %v295 = vpop.xlane.xlu0 %294
  %v296 = vsel %vm173, %v282, 0.0
  %297 = vadd.xlane.f32.xlu0 %v296
  %v298 = vpop.xlane.xlu0 %297
  %v299 = vsel %vm173, %v287, 0.0
  %300 = vadd.xlane.f32.xlu0 %v299
  %v301 = vpop.xlane.xlu0 %300
  %v302 = vmul.f32 %v272, %v272
  %v303 = vmul.f32 %v277, %v277
  %v304 = vmul.f32 %v282, %v282
  %v305 = vmul.f32 %v287, %v287
  %v306 = vsel %vm173, %v302, 0.0
  %307 = vadd.xlane.f32.xlu0 %v306
  %v308 = vpop.xlane.xlu0 %307
  %v309 = vsel %vm173, %v303, 0.0
  %310 = vadd.xlane.f32.xlu0 %v309
  %v311 = vpop.xlane.xlu0 %310
  %v312 = vsel %vm173, %v304, 0.0
  %313 = vadd.xlane.f32.xlu0 %v312
  %v314 = vpop.xlane.xlu0 %313
  %v315 = vsel %vm173, %v305, 0.0
  %316 = vadd.xlane.f32.xlu0 %v315
  %v317 = vpop.xlane.xlu0 %316
  %v318 = vadd.f32 %v176, %v292
  %v319 = vadd.f32 %v179, %v295
  %v320 = vadd.f32 %v182, %v298
  %v321 = vadd.f32 %v185, %v301
  %v322 = vadd.f32 %v192, %v308
  %v323 = vadd.f32 %v195, %v311
  %v324 = vadd.f32 %v198, %v314
  %v325 = vadd.f32 %v201, %v317
  %v326 = vmul.f32 %v318, 0.03125
  %v327 = vmul.f32 %v319, 0.03125
  %v328 = vmul.f32 %v320, 0.03125
  %v329 = vmul.f32 %v321, 0.03125
  %v330 = vmul.f32 %v322, 0.03125
  %v331 = vmul.f32 %v323, 0.03125
  %v332 = vmul.f32 %v324, 0.03125
  %v333 = vmul.f32 %v325, 0.03125
  %v334 = vmul.f32 %v326, %v326
  %v335 = vmul.f32 %v327, %v327
  %v336 = vmul.f32 %v328, %v328
  %v337 = vmul.f32 %v329, %v329
  %v338 = vsub.f32 %v330, %v334
  %v339 = vsub.f32 %v331, %v335
  %v340 = vsub.f32 %v332, %v336
  %v341 = vsub.f32 %v333, %v337
  %v342 = vadd.f32 %v338, 1e-05
  %v343 = vadd.f32 %v339, 1e-05
  %v344 = vadd.f32 %v340, 1e-05
  %v345 = vadd.f32 %v341, 1e-05
  %v346 = vrsqrt.pop %v342
  %v347 = vrsqrt.pop %v343
  %v348 = vrsqrt.pop %v344
  %v349 = vrsqrt.pop %v345
  %v350 = vmul.f32 %v43, %v346
  %v351 = vmul.f32 %v44, %v347
  %v352 = vmul.f32 %v45, %v348
  %v353 = vmul.f32 %v46, %v349
  %v354 = vmul.f32 %v326, %v350
  %v355 = vmul.f32 %v327, %v351
  %v356 = vmul.f32 %v328, %v352
  %v357 = vmul.f32 %v329, %v353
  %v358 = vsub.f32 %v47, %v354
  %v359 = vsub.f32 %v48, %v355
  %v360 = vsub.f32 %v49, %v356
  %v361 = vsub.f32 %v50, %v357
  %363 = vset.pattern.permute.xlu0 0
  %364 = vperm.xlu0 %363, %v350
  %v365 = vpop.permute.xlu0 %364
  %368 = vset.pattern.permute.xlu0 0
  %369 = vperm.xlu0 %368, %v351
  %v370 = vpop.permute.xlu0 %369
  %373 = vset.pattern.permute.xlu0 0
  %374 = vperm.xlu0 %373, %v352
  %v375 = vpop.permute.xlu0 %374
  %378 = vset.pattern.permute.xlu0 0
  %379 = vperm.xlu0 %378, %v353
  %v380 = vpop.permute.xlu0 %379
  %v382 = vmul.f32 %v155, %v365
  %v383 = vmul.f32 %v160, %v370
  %v384 = vmul.f32 %v165, %v375
  %v385 = vmul.f32 %v170, %v380
  %387 = vset.pattern.permute.xlu0 0
  %388 = vperm.xlu0 %387, %v358
  %v389 = vpop.permute.xlu0 %388
  %392 = vset.pattern.permute.xlu0 0
  %393 = vperm.xlu0 %392, %v359
  %v394 = vpop.permute.xlu0 %393
  %397 = vset.pattern.permute.xlu0 0
  %398 = vperm.xlu0 %397, %v360
  %v399 = vpop.permute.xlu0 %398
  %402 = vset.pattern.permute.xlu0 0
  %403 = vperm.xlu0 %402, %v361
  %v404 = vpop.permute.xlu0 %403
  %v406 = vadd.f32 %v382, %v389
  %v407 = vadd.f32 %v383, %v394
  %v408 = vadd.f32 %v384, %v399
  %v409 = vadd.f32 %v385, %v404
  %v410 = vmax.f32 %v406, 0.0
  %v411 = vmax.f32 %v407, 0.0
  %v412 = vmax.f32 %v408, 0.0
  %v413 = vmax.f32 %v409, 0.0
  %v414 = vmul.f32 %v272, %v365
  %v415 = vmul.f32 %v277, %v370
  %v416 = vmul.f32 %v282, %v375
  %v417 = vmul.f32 %v287, %v380
  %v418 = vadd.f32 %v414, %v389
  %v419 = vadd.f32 %v415, %v394
  %v420 = vadd.f32 %v416, %v399
  %v421 = vadd.f32 %v417, %v404
  %v422 = vmax.f32 %v418, 0.0
  %v423 = vmax.f32 %v419, 0.0
  %v424 = vmax.f32 %v420, 0.0
  %v425 = vmax.f32 %v421, 0.0
  %v426 = vld [vmem:[%s5] sm:$0xff]
  %v427 = vld [vmem:[%s5 + $0x8] sm:$0xff]
  %v428 = vld [vmem:[%s5 + $0x10] sm:$0xff]
  %v429 = vld [vmem:[%s5 + $0x18] sm:$0xff]
  %v430 = vld [vmem:[%s5 + $0x20] sm:$0xff]
  %v431 = vld [vmem:[%s5 + $0x28] sm:$0xff]
  %v432 = vld [vmem:[%s5 + $0x30] sm:$0xff]
  %v433 = vld [vmem:[%s5 + $0x38] sm:$0xff]
  %v434 = vld [vmem:[%s6] sm:$0xff]
  %v435 = vld [vmem:[%s6 + $0x8] sm:$0xff]
  %v436 = vld [vmem:[%s6 + $0x10] sm:$0xff]
  %v437 = vld [vmem:[%s6 + $0x18] sm:$0xff]
  %v438 = vld [vmem:[%s6 + $0x20] sm:$0xff]
  %v439 = vld [vmem:[%s6 + $0x28] sm:$0xff]
  %v440 = vld [vmem:[%s6 + $0x30] sm:$0xff]
  %v441 = vld [vmem:[%s6 + $0x38] sm:$0xff]
  %v442 = vld [vmem:[%s7] sm:$0xff]
  %v443 = vld [vmem:[%s7 + $0x8] sm:$0xff]
  %v444 = vld [vmem:[%s7 + $0x10] sm:$0xff]
  %v445 = vld [vmem:[%s7 + $0x18] sm:$0xff]
  %v446 = vld [vmem:[%s7 + $0x20] sm:$0xff]
  %v447 = vld [vmem:[%s7 + $0x28] sm:$0xff]
  %v448 = vld [vmem:[%s7 + $0x30] sm:$0xff]
  %v449 = vld [vmem:[%s7 + $0x38] sm:$0xff]
  %v450 = vld [vmem:[%s8] sm:$0xff]
  %v451 = vld [vmem:[%s8 + $0x8] sm:$0xff]
  %v452 = vld [vmem:[%s8 + $0x10] sm:$0xff]
  %v453 = vld [vmem:[%s8 + $0x18] sm:$0xff]
  %v454 = vld [vmem:[%s8 + $0x20] sm:$0xff]
  %v455 = vld [vmem:[%s8 + $0x28] sm:$0xff]
  %v456 = vld [vmem:[%s8 + $0x30] sm:$0xff]
  %v457 = vld [vmem:[%s8 + $0x38] sm:$0xff]
  %459 = vset.pattern.permute.xlu0 0
  %460 = vperm.xlu0 %459, %v434
  %v461 = vpop.permute.xlu0 %460
  %464 = vset.pattern.permute.xlu0 0
  %465 = vperm.xlu0 %464, %v435
  %v466 = vpop.permute.xlu0 %465
  %469 = vset.pattern.permute.xlu0 0
  %470 = vperm.xlu0 %469, %v436
  %v471 = vpop.permute.xlu0 %470
  %474 = vset.pattern.permute.xlu0 0
  %475 = vperm.xlu0 %474, %v437
  %v476 = vpop.permute.xlu0 %475
  %479 = vset.pattern.permute.xlu0 0
  %480 = vperm.xlu0 %479, %v438
  %v481 = vpop.permute.xlu0 %480
  %484 = vset.pattern.permute.xlu0 0
  %485 = vperm.xlu0 %484, %v439
  %v486 = vpop.permute.xlu0 %485
  %489 = vset.pattern.permute.xlu0 0
  %490 = vperm.xlu0 %489, %v440
  %v491 = vpop.permute.xlu0 %490
  %494 = vset.pattern.permute.xlu0 0
  %495 = vperm.xlu0 %494, %v441
  %v496 = vpop.permute.xlu0 %495
  %vm498 = vcmask 261120
  %v500 = vsel %vm498, %v426, 0
  %v503 = vsel %vm498, %v427, 0
  %v506 = vsel %vm498, %v428, 0
  %v509 = vsel %vm498, %v429, 0
  %v512 = vsel %vm498, %v430, 0
  %v515 = vsel %vm498, %v431, 0
  %v518 = vsel %vm498, %v432, 0
  %v521 = vsel %vm498, %v433, 0
  %523 = vmatprep.subr.mxu0 0.0
  %524 = vmatpush1.msra.mxu0 %v410
  %525 = vmatprep.subr.mxu0 0.0
  %526 = vmatpush1.msra.mxu0 %v411
  %527 = vmatprep.subr.mxu0 0.0
  %528 = vmatpush1.msra.mxu0 %v412
  %529 = vmatprep.subr.mxu0 0.0
  %530 = vmatpush1.msra.mxu0 %v413
  %531 = vmatprep.subr.mxu0 0.0
  %532 = vmatpush1.msra.mxu0 0.0
  %533 = vmatprep.subr.mxu0 0.0
  %534 = vmatpush1.msra.mxu0 0.0
  %535 = vmatprep.subr.mxu0 0.0
  %536 = vmatpush1.msra.mxu0 0.0
  %537 = vmatprep.subr.mxu0 0.0
  %538 = vmatpush1.msra.mxu0 0.0
  %539 = vmatprep.subr.mxu0 0.0
  %540 = vmatpush1.msra.mxu0 0.0
  %541 = vmatprep.subr.mxu0 0.0
  %542 = vmatpush1.msra.mxu0 0.0
  %543 = vmatprep.subr.mxu0 0.0
  %544 = vmatpush1.msra.mxu0 0.0
  %545 = vmatprep.subr.mxu0 0.0
  %546 = vmatpush1.msra.mxu0 0.0
  %547 = vmatprep.subr.mxu0 0.0
  %548 = vmatpush1.msra.mxu0 0.0
  %549 = vmatprep.subr.mxu0 0.0
  %550 = vmatpush1.msra.mxu0 0.0
  %551 = vmatprep.subr.mxu0 0.0
  %552 = vmatpush1.msra.mxu0 0.0
  %553 = vmatprep.subr.mxu0 0.0
  %554 = vmatpush1.msra.mxu0 0.0
  %555 = vmatprep.subr.mxu0 0.0
  %556 = vmatpush1.msra.mxu0 0.0
  %557 = vmatprep.subr.mxu0 0.0
  %558 = vmatpush1.msra.mxu0 0.0
  %559 = vmatprep.subr.mxu0 0.0
  %560 = vmatpush1.msra.mxu0 0.0
  %561 = vmatprep.subr.mxu0 0.0
  %562 = vmatpush1.msra.mxu0 0.0
  %563 = vmatprep.subr.mxu0 0.0
  %564 = vmatpush1.msra.mxu0 0.0
  %565 = vmatprep.subr.mxu0 0.0
  %566 = vmatpush1.msra.mxu0 0.0
  %567 = vmatprep.subr.mxu0 0.0
  %568 = vmatpush1.msra.mxu0 0.0
  %569 = vmatprep.subr.mxu0 0.0
  %570 = vmatpush1.msra.mxu0 0.0
  %571 = vmatprep.subr.mxu0 0.0
  %572 = vmatpush1.msra.mxu0 0.0
  %573 = vmatprep.subr.mxu0 0.0
  %574 = vmatpush1.msra.mxu0 0.0
  %575 = vmatprep.subr.mxu0 0.0
  %576 = vmatpush1.msra.mxu0 0.0
  %577 = vmatprep.subr.mxu0 0.0
  %578 = vmatpush1.msra.mxu0 0.0
  %579 = vmatprep.subr.mxu0 0.0
  %580 = vmatpush1.msra.mxu0 0.0
  %581 = vmatprep.subr.mxu0 0.0
  %582 = vmatpush1.msra.mxu0 0.0
  %583 = vmatprep.subr.mxu0 0.0
  %584 = vmatpush1.msra.mxu0 0.0
  %585 = vmatprep.subr.mxu0 0.0
  %586 = vmatpush1.msra.mxu0 0.0
  %587 = vmatprep.mubr.f32.mxu0 0.0
  %588 = vmatmul.mubr.f32.gmra.mrb[0].mxu0 %v500
  %v589 = vpop.f32.mrb[0].mxu0
  %v590 = vadd.f32 %v461, %v589
  %v591 = vpop.f32.mrb[0].mxu0
  %592 = vmatprep.mubr.f32.mxu0 0.0
  %593 = vmatmul.mubr.f32.gmra.mrb[0].mxu0 %v503
  %v594 = vpop.f32.mrb[0].mxu0
  %v595 = vadd.f32 %v466, %v594
  %v596 = vpop.f32.mrb[0].mxu0
  %597 = vmatprep.mubr.f32.mxu0 0.0
  %598 = vmatmul.mubr.f32.gmra.mrb[0].mxu0 %v506
  %v599 = vpop.f32.mrb[0].mxu0
  %v600 = vadd.f32 %v471, %v599
  %v601 = vpop.f32.mrb[0].mxu0
  %602 = vmatprep.mubr.f32.mxu0 0.0
  %603 = vmatmul.mubr.f32.gmra.mrb[0].mxu0 %v509
  %v604 = vpop.f32.mrb[0].mxu0
  %v605 = vadd.f32 %v476, %v604
  %v606 = vpop.f32.mrb[0].mxu0
  %607 = vmatprep.mubr.f32.mxu0 0.0
  %608 = vmatmul.mubr.f32.gmra.mrb[0].mxu0 %v512
  %v609 = vpop.f32.mrb[0].mxu0
  %v610 = vadd.f32 %v481, %v609
  %v611 = vpop.f32.mrb[0].mxu0
  %612 = vmatprep.mubr.f32.mxu0 0.0
  %613 = vmatmul.mubr.f32.gmra.mrb[0].mxu0 %v515
  %v614 = vpop.f32.mrb[0].mxu0
  %v615 = vadd.f32 %v486, %v614
  %v616 = vpop.f32.mrb[0].mxu0
  %617 = vmatprep.mubr.f32.mxu0 0.0
  %618 = vmatmul.mubr.f32.gmra.mrb[0].mxu0 %v518
  %v619 = vpop.f32.mrb[0].mxu0
  %v620 = vadd.f32 %v491, %v619
  %v621 = vpop.f32.mrb[0].mxu0
  %622 = vmatprep.mubr.f32.mxu0 0.0
  %623 = vmatmul.mubr.f32.gmra.mrb[0].mxu0 %v521
  %v624 = vpop.f32.mrb[0].mxu0
  %v625 = vadd.f32 %v496, %v624
  %v626 = vpop.f32.mrb[0].mxu0
  %627 = vdwg.mxu0
  %v628 = vsel %vm173, %v590, 0.0
  %629 = vadd.xlane.f32.xlu0 %v628
  %v630 = vpop.xlane.xlu0 %629
  %v631 = vsel %vm173, %v595, 0.0
  %632 = vadd.xlane.f32.xlu0 %v631
  %v633 = vpop.xlane.xlu0 %632
  %v634 = vsel %vm173, %v600, 0.0
  %635 = vadd.xlane.f32.xlu0 %v634
  %v636 = vpop.xlane.xlu0 %635
  %v637 = vsel %vm173, %v605, 0.0
  %638 = vadd.xlane.f32.xlu0 %v637
  %v639 = vpop.xlane.xlu0 %638
  %v640 = vsel %vm173, %v610, 0.0
  %641 = vadd.xlane.f32.xlu0 %v640
  %v642 = vpop.xlane.xlu0 %641
  %v643 = vsel %vm173, %v615, 0.0
  %644 = vadd.xlane.f32.xlu0 %v643
  %v645 = vpop.xlane.xlu0 %644
  %v646 = vsel %vm173, %v620, 0.0
  %647 = vadd.xlane.f32.xlu0 %v646
  %v648 = vpop.xlane.xlu0 %647
  %v649 = vsel %vm173, %v625, 0.0
  %650 = vadd.xlane.f32.xlu0 %v649
  %v651 = vpop.xlane.xlu0 %650
  %v652 = vmul.f32 %v590, %v590
  %v653 = vmul.f32 %v595, %v595
  %v654 = vmul.f32 %v600, %v600
  %v655 = vmul.f32 %v605, %v605
  %v656 = vmul.f32 %v610, %v610
  %v657 = vmul.f32 %v615, %v615
  %v658 = vmul.f32 %v620, %v620
  %v659 = vmul.f32 %v625, %v625
  %v660 = vsel %vm173, %v652, 0.0
  %661 = vadd.xlane.f32.xlu0 %v660
  %v662 = vpop.xlane.xlu0 %661
  %v663 = vsel %vm173, %v653, 0.0
  %664 = vadd.xlane.f32.xlu0 %v663
  %v665 = vpop.xlane.xlu0 %664
  %v666 = vsel %vm173, %v654, 0.0
  %667 = vadd.xlane.f32.xlu0 %v666
  %v668 = vpop.xlane.xlu0 %667
  %v669 = vsel %vm173, %v655, 0.0
  %670 = vadd.xlane.f32.xlu0 %v669
  %v671 = vpop.xlane.xlu0 %670
  %v672 = vsel %vm173, %v656, 0.0
  %673 = vadd.xlane.f32.xlu0 %v672
  %v674 = vpop.xlane.xlu0 %673
  %v675 = vsel %vm173, %v657, 0.0
  %676 = vadd.xlane.f32.xlu0 %v675
  %v677 = vpop.xlane.xlu0 %676
  %v678 = vsel %vm173, %v658, 0.0
  %679 = vadd.xlane.f32.xlu0 %v678
  %v680 = vpop.xlane.xlu0 %679
  %v681 = vsel %vm173, %v659, 0.0
  %682 = vadd.xlane.f32.xlu0 %v681
  %v683 = vpop.xlane.xlu0 %682
  %684 = vmatprep.subr.mxu0 0.0
  %685 = vmatpush1.msra.mxu0 %v422
  %686 = vmatprep.subr.mxu0 0.0
  %687 = vmatpush1.msra.mxu0 %v423
  %688 = vmatprep.subr.mxu0 0.0
  %689 = vmatpush1.msra.mxu0 %v424
  %690 = vmatprep.subr.mxu0 0.0
  %691 = vmatpush1.msra.mxu0 %v425
  %692 = vmatprep.subr.mxu0 0.0
  %693 = vmatpush1.msra.mxu0 0.0
  %694 = vmatprep.subr.mxu0 0.0
  %695 = vmatpush1.msra.mxu0 0.0
  %696 = vmatprep.subr.mxu0 0.0
  %697 = vmatpush1.msra.mxu0 0.0
  %698 = vmatprep.subr.mxu0 0.0
  %699 = vmatpush1.msra.mxu0 0.0
  %700 = vmatprep.subr.mxu0 0.0
  %701 = vmatpush1.msra.mxu0 0.0
  %702 = vmatprep.subr.mxu0 0.0
  %703 = vmatpush1.msra.mxu0 0.0
  %704 = vmatprep.subr.mxu0 0.0
  %705 = vmatpush1.msra.mxu0 0.0
  %706 = vmatprep.subr.mxu0 0.0
  %707 = vmatpush1.msra.mxu0 0.0
  %708 = vmatprep.subr.mxu0 0.0
  %709 = vmatpush1.msra.mxu0 0.0
  %710 = vmatprep.subr.mxu0 0.0
  %711 = vmatpush1.msra.mxu0 0.0
  %712 = vmatprep.subr.mxu0 0.0
  %713 = vmatpush1.msra.mxu0 0.0
  %714 = vmatprep.subr.mxu0 0.0
  %715 = vmatpush1.msra.mxu0 0.0
  %716 = vmatprep.subr.mxu0 0.0
  %717 = vmatpush1.msra.mxu0 0.0
  %718 = vmatprep.subr.mxu0 0.0
  %719 = vmatpush1.msra.mxu0 0.0
  %720 = vmatprep.subr.mxu0 0.0
  %721 = vmatpush1.msra.mxu0 0.0
  %722 = vmatprep.subr.mxu0 0.0
  %723 = vmatpush1.msra.mxu0 0.0
  %724 = vmatprep.subr.mxu0 0.0
  %725 = vmatpush1.msra.mxu0 0.0
  %726 = vmatprep.subr.mxu0 0.0
  %727 = vmatpush1.msra.mxu0 0.0
  %728 = vmatprep.subr.mxu0 0.0
  %729 = vmatpush1.msra.mxu0 0.0
  %730 = vmatprep.subr.mxu0 0.0
  %731 = vmatpush1.msra.mxu0 0.0
  %732 = vmatprep.subr.mxu0 0.0
  %733 = vmatpush1.msra.mxu0 0.0
  %734 = vmatprep.subr.mxu0 0.0
  %735 = vmatpush1.msra.mxu0 0.0
  %736 = vmatprep.subr.mxu0 0.0
  %737 = vmatpush1.msra.mxu0 0.0
  %738 = vmatprep.subr.mxu0 0.0
  %739 = vmatpush1.msra.mxu0 0.0
  %740 = vmatprep.subr.mxu0 0.0
  %741 = vmatpush1.msra.mxu0 0.0
  %742 = vmatprep.subr.mxu0 0.0
  %743 = vmatpush1.msra.mxu0 0.0
  %744 = vmatprep.subr.mxu0 0.0
  %745 = vmatpush1.msra.mxu0 0.0
  %746 = vmatprep.subr.mxu0 0.0
  %747 = vmatpush1.msra.mxu0 0.0
  %748 = vmatprep.mubr.f32.mxu0 0.0
  %749 = vmatmul.mubr.f32.gmra.mrb[0].mxu0 %v500
  %v750 = vpop.f32.mrb[0].mxu0
  %v751 = vadd.f32 %v461, %v750
  %v752 = vpop.f32.mrb[0].mxu0
  %753 = vmatprep.mubr.f32.mxu0 0.0
  %754 = vmatmul.mubr.f32.gmra.mrb[0].mxu0 %v503
  %v755 = vpop.f32.mrb[0].mxu0
  %v756 = vadd.f32 %v466, %v755
  %v757 = vpop.f32.mrb[0].mxu0
  %758 = vmatprep.mubr.f32.mxu0 0.0
  %759 = vmatmul.mubr.f32.gmra.mrb[0].mxu0 %v506
  %v760 = vpop.f32.mrb[0].mxu0
  %v761 = vadd.f32 %v471, %v760
  %v762 = vpop.f32.mrb[0].mxu0
  %763 = vmatprep.mubr.f32.mxu0 0.0
  %764 = vmatmul.mubr.f32.gmra.mrb[0].mxu0 %v509
  %v765 = vpop.f32.mrb[0].mxu0
  %v766 = vadd.f32 %v476, %v765
  %v767 = vpop.f32.mrb[0].mxu0
  %768 = vmatprep.mubr.f32.mxu0 0.0
  %769 = vmatmul.mubr.f32.gmra.mrb[0].mxu0 %v512
  %v770 = vpop.f32.mrb[0].mxu0
  %v771 = vadd.f32 %v481, %v770
  %v772 = vpop.f32.mrb[0].mxu0
  %773 = vmatprep.mubr.f32.mxu0 0.0
  %774 = vmatmul.mubr.f32.gmra.mrb[0].mxu0 %v515
  %v775 = vpop.f32.mrb[0].mxu0
  %v776 = vadd.f32 %v486, %v775
  %v777 = vpop.f32.mrb[0].mxu0
  %778 = vmatprep.mubr.f32.mxu0 0.0
  %779 = vmatmul.mubr.f32.gmra.mrb[0].mxu0 %v518
  %v780 = vpop.f32.mrb[0].mxu0
  %v781 = vadd.f32 %v491, %v780
  %v782 = vpop.f32.mrb[0].mxu0
  %783 = vmatprep.mubr.f32.mxu0 0.0
  %784 = vmatmul.mubr.f32.gmra.mrb[0].mxu0 %v521
  %v785 = vpop.f32.mrb[0].mxu0
  %v786 = vadd.f32 %v496, %v785
  %v787 = vpop.f32.mrb[0].mxu0
  %788 = vdwg.mxu0
  %v789 = vsel %vm173, %v751, 0.0
  %790 = vadd.xlane.f32.xlu0 %v789
  %v791 = vpop.xlane.xlu0 %790
  %v792 = vsel %vm173, %v756, 0.0
  %793 = vadd.xlane.f32.xlu0 %v792
  %v794 = vpop.xlane.xlu0 %793
  %v795 = vsel %vm173, %v761, 0.0
  %796 = vadd.xlane.f32.xlu0 %v795
  %v797 = vpop.xlane.xlu0 %796
  %v798 = vsel %vm173, %v766, 0.0
  %799 = vadd.xlane.f32.xlu0 %v798
  %v800 = vpop.xlane.xlu0 %799
  %v801 = vsel %vm173, %v771, 0.0
  %802 = vadd.xlane.f32.xlu0 %v801
  %v803 = vpop.xlane.xlu0 %802
  %v804 = vsel %vm173, %v776, 0.0
  %805 = vadd.xlane.f32.xlu0 %v804
  %v806 = vpop.xlane.xlu0 %805
  %v807 = vsel %vm173, %v781, 0.0
  %808 = vadd.xlane.f32.xlu0 %v807
  %v809 = vpop.xlane.xlu0 %808
  %v810 = vsel %vm173, %v786, 0.0
  %811 = vadd.xlane.f32.xlu0 %v810
  %v812 = vpop.xlane.xlu0 %811
  %v813 = vmul.f32 %v751, %v751
  %v814 = vmul.f32 %v756, %v756
  %v815 = vmul.f32 %v761, %v761
  %v816 = vmul.f32 %v766, %v766
  %v817 = vmul.f32 %v771, %v771
  %v818 = vmul.f32 %v776, %v776
  %v819 = vmul.f32 %v781, %v781
  %v820 = vmul.f32 %v786, %v786
  %v821 = vsel %vm173, %v813, 0.0
  %822 = vadd.xlane.f32.xlu0 %v821
  %v823 = vpop.xlane.xlu0 %822
  %v824 = vsel %vm173, %v814, 0.0
  %825 = vadd.xlane.f32.xlu0 %v824
  %v826 = vpop.xlane.xlu0 %825
  %v827 = vsel %vm173, %v815, 0.0
  %828 = vadd.xlane.f32.xlu0 %v827
  %v829 = vpop.xlane.xlu0 %828
  %v830 = vsel %vm173, %v816, 0.0
  %831 = vadd.xlane.f32.xlu0 %v830
  %v832 = vpop.xlane.xlu0 %831
  %v833 = vsel %vm173, %v817, 0.0
  %834 = vadd.xlane.f32.xlu0 %v833
  %v835 = vpop.xlane.xlu0 %834
  %v836 = vsel %vm173, %v818, 0.0
  %837 = vadd.xlane.f32.xlu0 %v836
  %v838 = vpop.xlane.xlu0 %837
  %v839 = vsel %vm173, %v819, 0.0
  %840 = vadd.xlane.f32.xlu0 %v839
  %v841 = vpop.xlane.xlu0 %840
  %v842 = vsel %vm173, %v820, 0.0
  %843 = vadd.xlane.f32.xlu0 %v842
  %v844 = vpop.xlane.xlu0 %843
  %v845 = vadd.f32 %v630, %v791
  %v846 = vadd.f32 %v633, %v794
  %v847 = vadd.f32 %v636, %v797
  %v848 = vadd.f32 %v639, %v800
  %v849 = vadd.f32 %v642, %v803
  %v850 = vadd.f32 %v645, %v806
  %v851 = vadd.f32 %v648, %v809
  %v852 = vadd.f32 %v651, %v812
  %v853 = vadd.f32 %v662, %v823
  %v854 = vadd.f32 %v665, %v826
  %v855 = vadd.f32 %v668, %v829
  %v856 = vadd.f32 %v671, %v832
  %v857 = vadd.f32 %v674, %v835
  %v858 = vadd.f32 %v677, %v838
  %v859 = vadd.f32 %v680, %v841
  %v860 = vadd.f32 %v683, %v844
  %v861 = vmul.f32 %v845, 0.03125
  %v862 = vmul.f32 %v846, 0.03125
  %v863 = vmul.f32 %v847, 0.03125
  %v864 = vmul.f32 %v848, 0.03125
  %v865 = vmul.f32 %v849, 0.03125
  %v866 = vmul.f32 %v850, 0.03125
  %v867 = vmul.f32 %v851, 0.03125
  %v868 = vmul.f32 %v852, 0.03125
  %v869 = vmul.f32 %v853, 0.03125
  %v870 = vmul.f32 %v854, 0.03125
  %v871 = vmul.f32 %v855, 0.03125
  %v872 = vmul.f32 %v856, 0.03125
  %v873 = vmul.f32 %v857, 0.03125
  %v874 = vmul.f32 %v858, 0.03125
  %v875 = vmul.f32 %v859, 0.03125
  %v876 = vmul.f32 %v860, 0.03125
  %v877 = vmul.f32 %v861, %v861
  %v878 = vmul.f32 %v862, %v862
  %v879 = vmul.f32 %v863, %v863
  %v880 = vmul.f32 %v864, %v864
  %v881 = vmul.f32 %v865, %v865
  %v882 = vmul.f32 %v866, %v866
  %v883 = vmul.f32 %v867, %v867
  %v884 = vmul.f32 %v868, %v868
  %v885 = vsub.f32 %v869, %v877
  %v886 = vsub.f32 %v870, %v878
  %v887 = vsub.f32 %v871, %v879
  %v888 = vsub.f32 %v872, %v880
  %v889 = vsub.f32 %v873, %v881
  %v890 = vsub.f32 %v874, %v882
  %v891 = vsub.f32 %v875, %v883
  %v892 = vsub.f32 %v876, %v884
  %v893 = vadd.f32 %v885, 1e-05
  %v894 = vadd.f32 %v886, 1e-05
  %v895 = vadd.f32 %v887, 1e-05
  %v896 = vadd.f32 %v888, 1e-05
  %v897 = vadd.f32 %v889, 1e-05
  %v898 = vadd.f32 %v890, 1e-05
  %v899 = vadd.f32 %v891, 1e-05
  %v900 = vadd.f32 %v892, 1e-05
  %v901 = vrsqrt.pop %v893
  %v902 = vrsqrt.pop %v894
  %v903 = vrsqrt.pop %v895
  %v904 = vrsqrt.pop %v896
  %v905 = vrsqrt.pop %v897
  %v906 = vrsqrt.pop %v898
  %v907 = vrsqrt.pop %v899
  %v908 = vrsqrt.pop %v900
  %v909 = vmul.f32 %v442, %v901
  %v910 = vmul.f32 %v443, %v902
  %v911 = vmul.f32 %v444, %v903
  %v912 = vmul.f32 %v445, %v904
  %v913 = vmul.f32 %v446, %v905
  %v914 = vmul.f32 %v447, %v906
  %v915 = vmul.f32 %v448, %v907
  %v916 = vmul.f32 %v449, %v908
  %v917 = vmul.f32 %v861, %v909
  %v918 = vmul.f32 %v862, %v910
  %v919 = vmul.f32 %v863, %v911
  %v920 = vmul.f32 %v864, %v912
  %v921 = vmul.f32 %v865, %v913
  %v922 = vmul.f32 %v866, %v914
  %v923 = vmul.f32 %v867, %v915
  %v924 = vmul.f32 %v868, %v916
  %v925 = vsub.f32 %v450, %v917
  %v926 = vsub.f32 %v451, %v918
  %v927 = vsub.f32 %v452, %v919
  %v928 = vsub.f32 %v453, %v920
  %v929 = vsub.f32 %v454, %v921
  %v930 = vsub.f32 %v455, %v922
  %v931 = vsub.f32 %v456, %v923
  %v932 = vsub.f32 %v457, %v924
  %934 = vset.pattern.permute.xlu0 0
  %935 = vperm.xlu0 %934, %v909
  %v936 = vpop.permute.xlu0 %935
  %939 = vset.pattern.permute.xlu0 0
  %940 = vperm.xlu0 %939, %v910
  %v941 = vpop.permute.xlu0 %940
  %944 = vset.pattern.permute.xlu0 0
  %945 = vperm.xlu0 %944, %v911
  %v946 = vpop.permute.xlu0 %945
  %949 = vset.pattern.permute.xlu0 0
  %950 = vperm.xlu0 %949, %v912
  %v951 = vpop.permute.xlu0 %950
  %954 = vset.pattern.permute.xlu0 0
  %955 = vperm.xlu0 %954, %v913
  %v956 = vpop.permute.xlu0 %955
  %959 = vset.pattern.permute.xlu0 0
  %960 = vperm.xlu0 %959, %v914
  %v961 = vpop.permute.xlu0 %960
  %964 = vset.pattern.permute.xlu0 0
  %965 = vperm.xlu0 %964, %v915
  %v966 = vpop.permute.xlu0 %965
  %969 = vset.pattern.permute.xlu0 0
  %970 = vperm.xlu0 %969, %v916
  %v971 = vpop.permute.xlu0 %970
  %v973 = vmul.f32 %v590, %v936
  %v974 = vmul.f32 %v595, %v941
  %v975 = vmul.f32 %v600, %v946
  %v976 = vmul.f32 %v605, %v951
  %v977 = vmul.f32 %v610, %v956
  %v978 = vmul.f32 %v615, %v961
  %v979 = vmul.f32 %v620, %v966
  %v980 = vmul.f32 %v625, %v971
  %982 = vset.pattern.permute.xlu0 0
  %983 = vperm.xlu0 %982, %v925
  %v984 = vpop.permute.xlu0 %983
  %987 = vset.pattern.permute.xlu0 0
  %988 = vperm.xlu0 %987, %v926
  %v989 = vpop.permute.xlu0 %988
  %992 = vset.pattern.permute.xlu0 0
  %993 = vperm.xlu0 %992, %v927
  %v994 = vpop.permute.xlu0 %993
  %997 = vset.pattern.permute.xlu0 0
  %998 = vperm.xlu0 %997, %v928
  %v999 = vpop.permute.xlu0 %998
  %1002 = vset.pattern.permute.xlu0 0
  %1003 = vperm.xlu0 %1002, %v929
  %v1004 = vpop.permute.xlu0 %1003
  %1007 = vset.pattern.permute.xlu0 0
  %1008 = vperm.xlu0 %1007, %v930
  %v1009 = vpop.permute.xlu0 %1008
  %1012 = vset.pattern.permute.xlu0 0
  %1013 = vperm.xlu0 %1012, %v931
  %v1014 = vpop.permute.xlu0 %1013
  %1017 = vset.pattern.permute.xlu0 0
  %1018 = vperm.xlu0 %1017, %v932
  %v1019 = vpop.permute.xlu0 %1018
  %v1021 = vadd.f32 %v973, %v984
  %v1022 = vadd.f32 %v974, %v989
  %v1023 = vadd.f32 %v975, %v994
  %v1024 = vadd.f32 %v976, %v999
  %v1025 = vadd.f32 %v977, %v1004
  %v1026 = vadd.f32 %v978, %v1009
  %v1027 = vadd.f32 %v979, %v1014
  %v1028 = vadd.f32 %v980, %v1019
  %v1029 = vmax.f32 %v1021, 0.0
  %v1030 = vmax.f32 %v1022, 0.0
  %v1031 = vmax.f32 %v1023, 0.0
  %v1032 = vmax.f32 %v1024, 0.0
  %v1033 = vmax.f32 %v1025, 0.0
  %v1034 = vmax.f32 %v1026, 0.0
  %v1035 = vmax.f32 %v1027, 0.0
  %v1036 = vmax.f32 %v1028, 0.0
  %v1037 = vmul.f32 %v751, %v936
  %v1038 = vmul.f32 %v756, %v941
  %v1039 = vmul.f32 %v761, %v946
  %v1040 = vmul.f32 %v766, %v951
  %v1041 = vmul.f32 %v771, %v956
  %v1042 = vmul.f32 %v776, %v961
  %v1043 = vmul.f32 %v781, %v966
  %v1044 = vmul.f32 %v786, %v971
  %v1045 = vadd.f32 %v1037, %v984
  %v1046 = vadd.f32 %v1038, %v989
  %v1047 = vadd.f32 %v1039, %v994
  %v1048 = vadd.f32 %v1040, %v999
  %v1049 = vadd.f32 %v1041, %v1004
  %v1050 = vadd.f32 %v1042, %v1009
  %v1051 = vadd.f32 %v1043, %v1014
  %v1052 = vadd.f32 %v1044, %v1019
  %v1053 = vmax.f32 %v1045, 0.0
  %v1054 = vmax.f32 %v1046, 0.0
  %v1055 = vmax.f32 %v1047, 0.0
  %v1056 = vmax.f32 %v1048, 0.0
  %v1057 = vmax.f32 %v1049, 0.0
  %v1058 = vmax.f32 %v1050, 0.0
  %v1059 = vmax.f32 %v1051, 0.0
  %v1060 = vmax.f32 %v1052, 0.0
  %1061 = vst.msk [vmem:[%s9] sm:$0xff] %vm173, %v1029
  %1062 = vst.msk [vmem:[%s9 + $0x8] sm:$0xff] %vm173, %v1030
  %1063 = vst.msk [vmem:[%s9 + $0x10] sm:$0xff] %vm173, %v1031
  %1064 = vst.msk [vmem:[%s9 + $0x18] sm:$0xff] %vm173, %v1032
  %1065 = vst.msk [vmem:[%s9 + $0x20] sm:$0xff] %vm173, %v1033
  %1066 = vst.msk [vmem:[%s9 + $0x28] sm:$0xff] %vm173, %v1034
  %1067 = vst.msk [vmem:[%s9 + $0x30] sm:$0xff] %vm173, %v1035
  %1068 = vst.msk [vmem:[%s9 + $0x38] sm:$0xff] %vm173, %v1036
  %s1069 = scalar_lea.vmem %s9, 64
  %1070 = vst.msk [vmem:[%s1069] sm:$0xff] %vm173, %v1053
  %1071 = vst.msk [vmem:[%s1069 + $0x8] sm:$0xff] %vm173, %v1054
  %1072 = vst.msk [vmem:[%s1069 + $0x10] sm:$0xff] %vm173, %v1055
  %1073 = vst.msk [vmem:[%s1069 + $0x18] sm:$0xff] %vm173, %v1056
  %1074 = vst.msk [vmem:[%s1069 + $0x20] sm:$0xff] %vm173, %v1057
  %1075 = vst.msk [vmem:[%s1069 + $0x28] sm:$0xff] %vm173, %v1058
  %1076 = vst.msk [vmem:[%s1069 + $0x30] sm:$0xff] %vm173, %v1059
  %1077 = vst.msk [vmem:[%s1069 + $0x38] sm:$0xff] %vm173, %v1060
  // Predicated region
  $region38: #{mlp_net_forward.1} parent=0 // pred_check
    _
  $region39: #{mlp_net_forward.1} parent=0 // pred_check_branch
    %1079 = sbr.rel (0) target = $region41
  $region40: #{mlp_net_forward.1} parent=0 // pred_region
    _
  $region41: #{mlp_net_forward.1} parent=0 // pred_fallthru
    _
  // Predicated region
  $region42: #{mlp_net_forward.1} parent=0 // pred_check
    _
  $region43: #{mlp_net_forward.1} parent=0 // pred_check_branch
    %1081 = sbr.rel (0) target = $region45
  $region44: #{mlp_net_forward.1} parent=0 // pred_region
    _
  $region45: #{mlp_net_forward.1} parent=0 // pred_fallthru
    _

</llo_original>
